<compile_context>
chip_gen: v6e
topology: v6e:2x2x1
jax: 0.10.0
libtpu: 0.0.40
codegen_flags: <defaults>
</compile_context>

<pallas_src>
import functools

import jax
import jax.numpy as jnp
from jax.experimental import pallas as pl
from jax.experimental.pallas import tpu as pltpu

SUBLANE = 8  # f32 sublane width


def _round_up(n, m):
    return ((n + m - 1) // m) * m


def _leaky_relu(x, negative_slope=0.01):
    # Matches torch.nn.LeakyReLU default negative_slope=0.01
    return jnp.where(x >= 0, x, negative_slope * x)


def _mlp_kernel(x_ref, w1_ref, b1_ref, w2_ref, b2_ref, w3_ref, b3_ref, o_ref,
                *, compute_dtype):
    # MXU matmuls in `compute_dtype` with f32 accumulation; bias + LeakyReLU in f32.
    x = x_ref[...].astype(compute_dtype)
    h = jnp.dot(x, w1_ref[...], preferred_element_type=jnp.float32)
    h = _leaky_relu(h + b1_ref[...])
    h = jnp.dot(h.astype(compute_dtype), w2_ref[...],
                preferred_element_type=jnp.float32)
    h = _leaky_relu(h + b2_ref[...])
    y = jnp.dot(h.astype(compute_dtype), w3_ref[...],
                preferred_element_type=jnp.float32)
    o_ref[...] = (y + b3_ref[...]).astype(o_ref.dtype)


@functools.lru_cache(maxsize=1)
def _tpu_info():
    """(multi_tensorcore, vmem_capacity_bytes) for the local TPU, with fallbacks."""
    kind = ""
    try:
        kind = (jax.devices()[0].device_kind or "").lower()
    except Exception:
        pass
    # Chips where a "parallel" grid axis is actually sharded across TensorCores.
    multi_tc = ("v7" in kind) or ("v5p" in kind) or ("v4" in kind)
    vmem_bytes = 64 * 1024 * 1024  # conservative default (v7x per-TC VMEM)
    try:
        vmem_bytes = int(getattr(pltpu.get_tpu_info(), "vmem_capacity_bytes",
                                 vmem_bytes))
    except Exception:
        pass
    return multi_tc, vmem_bytes


def _choose_tb(batch, multi_tc):
    bp = _round_up(max(batch, 1), SUBLANE)
    if multi_tc and bp >= 2 * 256:
        # Split across TensorCores only when each tile keeps >= 256 rows.
        return min(512, _round_up(-(-bp // 2), SUBLANE))
    # Single-TC chips (and small batches): one big tile, fewer grid steps.
    return min(bp, 1024)


def prepare_params(params, *, compute_dtype=jnp.float32):
    """One-time parameter preparation (cast weights, 2-D-ify biases).

    Call once at init — NOT per forward — so the hot path is a single pallas_call.
    Weights use (in, out) layout, i.e. y = x @ W + b (PyTorch's x @ W.T + b with
    W pre-transposed).
    """
    def wcast(a):
        return jnp.asarray(a).astype(compute_dtype)

    def bcast(a):
        return jnp.atleast_2d(jnp.asarray(a).astype(jnp.float32))  # (1, out)

    return {"w1": wcast(params["w1"]), "b1": bcast(params["b1"]),
            "w2": wcast(params["w2"]), "b2": bcast(params["b2"]),
            "w3": wcast(params["w3"]), "b3": bcast(params["b3"])}


def simple_model_forward(x, prepared, *, compute_dtype=None, out_dtype=None,
                         tb=None):
    """x: (B, dim_in). prepared: output of prepare_params."""
    B, dim_in = x.shape
    H = prepared["w1"].shape[1]
    F = prepared["w3"].shape[1]
    if compute_dtype is None:
        compute_dtype = prepared["w1"].dtype
    if out_dtype is None:
        out_dtype = x.dtype

    multi_tc, vmem_cap = _tpu_info()
    if tb is None:
        tb = _choose_tb(B, multi_tc)
    tb = max(SUBLANE, _round_up(tb, SUBLANE))
    Bp = _round_up(B, tb)

    # Only the batch dim ever gets padded (zero rows are exact, sliced off below);
    # feature dims stay unpadded: blocks equal to the full array dims are legal.
    xp = x if Bp == B else jnp.pad(x, ((0, Bp - B), (0, 0)))

    grid = (Bp // tb,)
    const = lambda i: (0, 0)  # weights/biases: same (whole) block every step

    # VMEM budget: double-buffered x/out tiles + resident weights/biases +
    # f32 intermediate headroom; capped at 0.85x of physical VMEM.
    wbytes = jnp.dtype(prepared["w1"].dtype).itemsize
    obytes = jnp.dtype(out_dtype).itemsize
    xbytes = jnp.dtype(x.dtype).itemsize
    est = (2 * tb * (dim_in * xbytes + F * obytes)
           + 2 * ((dim_in * H + H * H + H * F) * wbytes + (2 * H + F) * 4)
           + 4 * tb * H * 4)
    vmem_limit = int(min(0.85 * vmem_cap, max(16 * 1024 * 1024, 2 * est)))

    kernel = functools.partial(_mlp_kernel, compute_dtype=compute_dtype)

    out = pl.pallas_call(
        kernel,
        out_shape=jax.ShapeDtypeStruct((Bp, F), out_dtype),
        grid_spec=pl.GridSpec(
            grid=grid,
            in_specs=[
                pl.BlockSpec((tb, dim_in), lambda i: (i, 0)),  # x tile (pipelined)
                pl.BlockSpec((dim_in, H), const),              # w1 (VMEM-resident)
                pl.BlockSpec((1, H), const),                   # b1
                pl.BlockSpec((H, H), const),                   # w2
                pl.BlockSpec((1, H), const),                   # b2
                pl.BlockSpec((H, F), const),                   # w3
                pl.BlockSpec((1, F), const),                   # b3
            ],
            out_specs=pl.BlockSpec((tb, F), lambda i: (i, 0)), # true-width stores
        ),
        compiler_params=pltpu.CompilerParams(
            dimension_semantics=("parallel",),
            vmem_limit_bytes=vmem_limit,
        ),
    )(xp, prepared["w1"], prepared["b1"], prepared["w2"], prepared["b2"],
      prepared["w3"], prepared["b3"])

    return out if Bp == B else out[:B]


def init_params(key, dim_in, num_neurons, num_features):
    """Deterministic init mimicking torch.nn.Linear (uniform +/- 1/sqrt(fan_in)),
    with weights stored as (in, out) so the kernel does x @ W + b."""
    ks = jax.random.split(key, 6)

    def linear(kw, kb, fan_in, fan_out):
        bound = 1.0 / jnp.sqrt(jnp.float32(fan_in))
        w = jax.random.uniform(kw, (fan_in, fan_out), jnp.float32, -bound, bound)
        b = jax.random.uniform(kb, (fan_out,), jnp.float32, -bound, bound)
        return w, b

    w1, b1 = linear(ks[0], ks[1], dim_in, num_neurons)
    w2, b2 = linear(ks[2], ks[3], num_neurons, num_neurons)
    w3, b3 = linear(ks[4], ks[5], num_neurons, num_features)
    return {"w1": w1, "b1": b1, "w2": w2, "b2": b2, "w3": w3, "b3": b3}


def reference_forward(x, p):
    h = _leaky_relu(x @ p["w1"] + p["b1"][None, :])
    h = _leaky_relu(h @ p["w2"] + p["b2"][None, :])
    return h @ p["w3"] + p["b3"][None, :]


if __name__ == "__main__":
    # SimpleModel(dim_in=32, num_neurons=64, num_features=16), batch=8.
    batch, dim_in, num_neurons, num_features = 8, 32, 64, 16

    key = jax.random.PRNGKey(0)
    kx, kp = jax.random.split(key)
    x = jax.random.normal(kx, (batch, dim_in), jnp.float32)
    params = init_params(kp, dim_in, num_neurons, num_features)

    ref = reference_forward(x, params)

    # Default f32 path: exact parity with the PyTorch f32 module.
    prep_f32 = prepare_params(params, compute_dtype=jnp.float32)
    out_f32 = jax.block_until_ready(simple_model_forward(x, prep_f32))
    assert out_f32.shape == (batch, num_features)
    assert jnp.allclose(out_f32, ref, atol=1e-4, rtol=1e-4), \
        float(jnp.max(jnp.abs(out_f32 - ref)))

    # Opt-in bf16-weight path (halves weight DMA / VMEM): looser tolerance.
    prep_bf16 = prepare_params(params, compute_dtype=jnp.bfloat16)
    out_bf16 = jax.block_until_ready(simple_model_forward(x, prep_bf16))
    assert out_bf16.shape == (batch, num_features)
    assert jnp.allclose(out_bf16, ref, atol=5e-2, rtol=5e-2), \
        float(jnp.max(jnp.abs(out_bf16 - ref)))

    print("KERNEL_OK")
</pallas_src>

<mosaic_0001>
module attributes {stable_mosaic.version = 11 : i64} {
  func.func @_mlp_kernel(%arg0: i32, %arg1: memref<8x32xf32, #tpu.memory_space<vmem>>, %arg2: memref<32x64xf32, #tpu.memory_space<vmem>>, %arg3: memref<1x64xf32, #tpu.memory_space<vmem>>, %arg4: memref<64x64xf32, #tpu.memory_space<vmem>>, %arg5: memref<1x64xf32, #tpu.memory_space<vmem>>, %arg6: memref<64x16xf32, #tpu.memory_space<vmem>>, %arg7: memref<1x16xf32, #tpu.memory_space<vmem>>, %arg8: memref<8x16xf32, #tpu.memory_space<vmem>>) attributes {dimension_semantics = [#tpu.dimension_semantics<parallel>], iteration_bounds = array<i64: 1>, scalar_prefetch = 0 : i64, scratch_operands = 0 : i64, tpu.core_type = #tpu.core_type<tc>, window_params = [{transform_indices = @transform_0, window_bounds = array<i64: 8, 32>}, {pipeline_mode = #tpu.pipeline_mode<synchronous>, transform_indices = @transform_1, window_bounds = array<i64: 32, 64>}, {pipeline_mode = #tpu.pipeline_mode<synchronous>, transform_indices = @transform_2, window_bounds = array<i64: 1, 64>}, {pipeline_mode = #tpu.pipeline_mode<synchronous>, transform_indices = @transform_3, window_bounds = array<i64: 64, 64>}, {pipeline_mode = #tpu.pipeline_mode<synchronous>, transform_indices = @transform_4, window_bounds = array<i64: 1, 64>}, {pipeline_mode = #tpu.pipeline_mode<synchronous>, transform_indices = @transform_5, window_bounds = array<i64: 64, 16>}, {pipeline_mode = #tpu.pipeline_mode<synchronous>, transform_indices = @transform_6, window_bounds = array<i64: 1, 16>}, {transform_indices = @transform_7, window_bounds = array<i64: 8, 16>}]} {
    %c0 = arith.constant 0 : index
    %c0_0 = arith.constant 0 : index
    %0 = vector.load %arg1[%c0, %c0_0] : memref<8x32xf32, #tpu.memory_space<vmem>>, vector<8x32xf32>
    %c0_1 = arith.constant 0 : index
    %c0_2 = arith.constant 0 : index
    %1 = vector.load %arg2[%c0_1, %c0_2] : memref<32x64xf32, #tpu.memory_space<vmem>>, vector<32x64xf32>
    %cst = arith.constant dense<0.000000e+00> : vector<8x64xf32>
    %2 = tpu.matmul %0, %1, %cst {dimension_numbers = #tpu.dot_dimension_numbers<[1], [0], [0], [1], [0, 0, 1, 1], [], []>} : vector<8x32xf32>, vector<32x64xf32>, vector<8x64xf32> -> vector<8x64xf32>
    %c0_3 = arith.constant 0 : index
    %c0_4 = arith.constant 0 : index
    %3 = vector.load %arg3[%c0_3, %c0_4] : memref<1x64xf32, #tpu.memory_space<vmem>>, vector<1x64xf32>
    %4 = vector.broadcast %3 : vector<1x64xf32> to vector<8x64xf32>
    %5 = arith.addf %2, %4 : vector<8x64xf32>
    %cst_5 = arith.constant 0.000000e+00 : f32
    %6 = vector.broadcast %cst_5 : f32 to vector<8x64xf32>
    %7 = arith.cmpf oge, %5, %6 : vector<8x64xf32>
    %cst_6 = arith.constant 0.00999999977 : f32
    %8 = vector.broadcast %cst_6 : f32 to vector<8x64xf32>
    %9 = arith.mulf %8, %5 : vector<8x64xf32>
    %10 = arith.select %7, %5, %9 : vector<8x64xi1>, vector<8x64xf32>
    %c0_7 = arith.constant 0 : index
    %c0_8 = arith.constant 0 : index
    %11 = vector.load %arg4[%c0_7, %c0_8] : memref<64x64xf32, #tpu.memory_space<vmem>>, vector<64x64xf32>
    %cst_9 = arith.constant dense<0.000000e+00> : vector<8x64xf32>
    %12 = tpu.matmul %10, %11, %cst_9 {dimension_numbers = #tpu.dot_dimension_numbers<[1], [0], [0], [1], [0, 0, 1, 1], [], []>} : vector<8x64xf32>, vector<64x64xf32>, vector<8x64xf32> -> vector<8x64xf32>
    %c0_10 = arith.constant 0 : index
    %c0_11 = arith.constant 0 : index
    %13 = vector.load %arg5[%c0_10, %c0_11] : memref<1x64xf32, #tpu.memory_space<vmem>>, vector<1x64xf32>
    %14 = vector.broadcast %13 : vector<1x64xf32> to vector<8x64xf32>
    %15 = arith.addf %12, %14 : vector<8x64xf32>
    %cst_12 = arith.constant 0.000000e+00 : f32
    %16 = vector.broadcast %cst_12 : f32 to vector<8x64xf32>
    %17 = arith.cmpf oge, %15, %16 : vector<8x64xf32>
    %cst_13 = arith.constant 0.00999999977 : f32
    %18 = vector.broadcast %cst_13 : f32 to vector<8x64xf32>
    %19 = arith.mulf %18, %15 : vector<8x64xf32>
    %20 = arith.select %17, %15, %19 : vector<8x64xi1>, vector<8x64xf32>
    %c0_14 = arith.constant 0 : index
    %c0_15 = arith.constant 0 : index
    %21 = vector.load %arg6[%c0_14, %c0_15] : memref<64x16xf32, #tpu.memory_space<vmem>>, vector<64x16xf32>
    %cst_16 = arith.constant dense<0.000000e+00> : vector<8x16xf32>
    %22 = tpu.matmul %20, %21, %cst_16 {dimension_numbers = #tpu.dot_dimension_numbers<[1], [0], [0], [1], [0, 0, 1, 1], [], []>} : vector<8x64xf32>, vector<64x16xf32>, vector<8x16xf32> -> vector<8x16xf32>
    %c0_17 = arith.constant 0 : index
    %c0_18 = arith.constant 0 : index
    %23 = vector.load %arg7[%c0_17, %c0_18] : memref<1x16xf32, #tpu.memory_space<vmem>>, vector<1x16xf32>
    %24 = vector.broadcast %23 : vector<1x16xf32> to vector<8x16xf32>
    %25 = arith.addf %22, %24 : vector<8x16xf32>
    %c0_19 = arith.constant 0 : index
    %c0_20 = arith.constant 0 : index
    %26 = vector.load %arg8[%c0_19, %c0_20] : memref<8x16xf32, #tpu.memory_space<vmem>>, vector<8x16xf32>
    tpu.vector_store %arg8[%c0_19, %c0_20], %25 {strides = array<i32>} : memref<8x16xf32, #tpu.memory_space<vmem>>, vector<8x16xf32>,
    return
  }
  func.func @transform_0(%arg0: i32) -> (i32, i32) {
    %c0_i32 = arith.constant 0 : i32
    %c0_i32_0 = arith.constant 0 : i32
    return %arg0, %c0_i32 : i32, i32
  }
  func.func @transform_1(%arg0: i32) -> (i32, i32) {
    %c0_i32 = arith.constant 0 : i32
    %c0_i32_0 = arith.constant 0 : i32
    %c0_i32_1 = arith.constant 0 : i32
    return %c0_i32, %c0_i32_0 : i32, i32
  }
  func.func @transform_2(%arg0: i32) -> (i32, i32) {
    %c0_i32 = arith.constant 0 : i32
    %c0_i32_0 = arith.constant 0 : i32
    %c0_i32_1 = arith.constant 0 : i32
    return %c0_i32, %c0_i32_0 : i32, i32
  }
  func.func @transform_3(%arg0: i32) -> (i32, i32) {
    %c0_i32 = arith.constant 0 : i32
    %c0_i32_0 = arith.constant 0 : i32
    %c0_i32_1 = arith.constant 0 : i32
    return %c0_i32, %c0_i32_0 : i32, i32
  }
  func.func @transform_4(%arg0: i32) -> (i32, i32) {
    %c0_i32 = arith.constant 0 : i32
    %c0_i32_0 = arith.constant 0 : i32
    %c0_i32_1 = arith.constant 0 : i32
    return %c0_i32, %c0_i32_0 : i32, i32
  }
  func.func @transform_5(%arg0: i32) -> (i32, i32) {
    %c0_i32 = arith.constant 0 : i32
    %c0_i32_0 = arith.constant 0 : i32
    %c0_i32_1 = arith.constant 0 : i32
    return %c0_i32, %c0_i32_0 : i32, i32
  }
  func.func @transform_6(%arg0: i32) -> (i32, i32) {
    %c0_i32 = arith.constant 0 : i32
    %c0_i32_0 = arith.constant 0 : i32
    %c0_i32_1 = arith.constant 0 : i32
    return %c0_i32, %c0_i32_0 : i32, i32
  }
  func.func @transform_7(%arg0: i32) -> (i32, i32) {
    %c0_i32 = arith.constant 0 : i32
    %c0_i32_0 = arith.constant 0 : i32
    return %arg0, %c0_i32 : i32, i32
  }
}

</mosaic_0001>

<llo_original>
// kernel: tpu_custom_call.1
$region0: #{tpu_custom_call.1}
  #allocation0 [shape = 'u32[]', space=smem, size = 0x4, offset = 0x4, fixed_abs, tag = 'smem constant byte address 0x4 - core index']
  #allocation1 [shape = 'u32[144,128]{1,0:T(1,128)}', space=vmem, size = 0x12000, scoped, tag = 'internal scratch']
  %s0 = inlined_call_operand.vmem [shape: f32[8,32], index: 0, kind: input, shape index: {}]
  %s1 = inlined_call_operand.hbm [shape: f32[32,64], index: 1, kind: input, shape index: {}]
  %s2 = inlined_call_operand.vmem [shape: f32[1,64], index: 2, kind: input, shape index: {}]
  %s3 = inlined_call_operand.vmem [shape: f32[64,64], index: 3, kind: input, shape index: {}]
  %s4 = inlined_call_operand.vmem [shape: f32[1,64], index: 4, kind: input, shape index: {}]
  %s5 = inlined_call_operand.vmem [shape: f32[64,16], index: 5, kind: input, shape index: {}]
  %s6 = inlined_call_operand.vmem [shape: f32[1,16], index: 6, kind: input, shape index: {}]
  %s7 = inlined_call_operand.hbm [shape: f32[8,16], index: 7, kind: output, shape index: {}]
  %s8 = sld [smem:[#allocation0]]
  $region42: #{tpu_custom_call.1} parent=0
    _
  %s10 = ssub.s32 1, %s8
  %s11 = scalar_select 0, %s10, %s8
  $region1: #{tpu_custom_call.1} parent=0
    #allocation2 [shape = 'u8[16384]{0}', space=vmem, size = 0x4000, scoped, tag = 'input window, operand 1, single buffered']
    #allocation3 [shape = 's32[1]{0}', space=sflag, size = 0x4, scoped, tag = 'scoped memory for tpu_custom_call.1']
    #allocation4 [shape = 's32[1]{0}', space=sflag, size = 0x4, scoped, tag = 'scoped memory for tpu_custom_call.1']
    #allocation5 [shape = 'u8[4096]{0}', space=vmem, size = 0x1000, scoped, tag = 'output window, operand 0, single buffered']
    %12 = vsyncpa [#allocation3], 0
    %13 = vsyncpa [#allocation4], 0
    // Predicated region
    $region2: #{tpu_custom_call.1} parent=1 // pred_check
      _
    $region3: #{tpu_custom_call.1} parent=1 // pred_check_branch
      %15 = sbr.rel (0) target = $region5
    $region4: #{tpu_custom_call.1} parent=1 // pred_region
      _
    $region5: #{tpu_custom_call.1} parent=1 // pred_fallthru
      _
    // Predicated region
    $region6: #{tpu_custom_call.1} parent=1 // pred_check
      _
    $region7: #{tpu_custom_call.1} parent=1 // pred_check_branch
      %17 = sbr.rel (0) target = $region9
    $region8: #{tpu_custom_call.1} parent=1 // pred_region
      %s19 = ssub.s32 512, 512
      %20 = vsyncadd [#allocation3], %s19
      %s21 = sshll.u32 [#allocation2], 4
      %s22 = int_to_ptr.vmem [resolvable:$true] %s21
      %27 = dma.hbm_to_vmem [thread:$0]  %s1, 512, %s22, [#allocation3], 128, 128, 8
    $region9: #{tpu_custom_call.1} parent=1 // pred_fallthru
      _
    // Predicated region
    $region10: #{tpu_custom_call.1} parent=1 // pred_check
      _
    $region11: #{tpu_custom_call.1} parent=1 // pred_check_branch
      %29 = sbr.rel (0) target = $region13
    $region12: #{tpu_custom_call.1} parent=1 // pred_region
      _
    $region13: #{tpu_custom_call.1} parent=1 // pred_fallthru
      _
    // Predicated region
    $region14: #{tpu_custom_call.1} parent=1 // pred_check
      _
    $region15: #{tpu_custom_call.1} parent=1 // pred_check_branch
      %31 = sbr.rel (0) target = $region17
    $region16: #{tpu_custom_call.1} parent=1 // pred_region
      _
    $region17: #{tpu_custom_call.1} parent=1 // pred_fallthru
      _
    // Predicated region
    $region18: #{tpu_custom_call.1} parent=1 // pred_check
      _
    $region19: #{tpu_custom_call.1} parent=1 // pred_check_branch
      %33 = sbr.rel (0) target = $region21
    $region20: #{tpu_custom_call.1} parent=1 // pred_region
      _
    $region21: #{tpu_custom_call.1} parent=1 // pred_fallthru
      _
    // Predicated region
    $region22: #{tpu_custom_call.1} parent=1 // pred_check
      _
    $region23: #{tpu_custom_call.1} parent=1 // pred_check_branch
      %35 = sbr.rel (0) target = $region25
    $region24: #{tpu_custom_call.1} parent=1 // pred_region
      _
    $region25: #{tpu_custom_call.1} parent=1 // pred_fallthru
      _
    // Predicated region
    $region26: #{tpu_custom_call.1} parent=1 // pred_check
      _
    $region27: #{tpu_custom_call.1} parent=1 // pred_check_branch
      %37 = sbr.rel (0) target = $region29
    $region28: #{tpu_custom_call.1} parent=1 // pred_region
      _
    $region29: #{tpu_custom_call.1} parent=1 // pred_fallthru
      _
    // Predicated region
    $region30: #{tpu_custom_call.1} parent=1 // pred_check
      _
    $region31: #{tpu_custom_call.1} parent=1 // pred_check_branch
      %39 = sbr.rel (0) target = $region33
    $region32: #{tpu_custom_call.1} parent=1 // pred_region
      %40 = dma.done [#allocation3], 512
    $region33: #{tpu_custom_call.1} parent=1 // pred_fallthru
      _
    %v41 = vld [vmem:[%s0] sm:$0xff]
    %v42 = vld [vmem:[#allocation2] sm:$0xff]
    %v43 = vld [vmem:[#allocation2 + $0x8] sm:$0xff]
    %v44 = vld [vmem:[#allocation2 + $0x10] sm:$0xff]
    %v45 = vld [vmem:[#allocation2 + $0x18] sm:$0xff]
    %v46 = vld [vmem:[%s2] sm:$0x1]
    %v48 = vlaneseq
    %v49 = vshrl.u32 %v48, 7
    %v50 = vsub.s32 0, %v49
    %v51 = vrot.slane %v46, %v50
    %vm53 = vcmask 261120
    %v55 = vsel %vm53, %v41, 0
    %57 = vmatprep.subr.mxu0 0.0
    %58 = vmatpush1.msra.mxu0 0.0
    %59 = vmatprep.subr.mxu0 0.0
    %60 = vmatpush1.msra.mxu0 0.0
    %61 = vmatprep.subr.mxu0 0.0
    %62 = vmatpush1.msra.mxu0 0.0
    %63 = vmatprep.subr.mxu0 0.0
    %64 = vmatpush1.msra.mxu0 0.0
    %65 = vmatprep.subr.mxu0 0.0
    %66 = vmatpush1.msra.mxu0 0.0
    %67 = vmatprep.subr.mxu0 0.0
    %68 = vmatpush1.msra.mxu0 0.0
    %69 = vmatprep.subr.mxu0 0.0
    %70 = vmatpush1.msra.mxu0 0.0
    %71 = vmatprep.subr.mxu0 0.0
    %72 = vmatpush1.msra.mxu0 0.0
    %73 = vmatprep.subr.mxu0 0.0
    %74 = vmatpush1.msra.mxu0 0.0
    %75 = vmatprep.subr.mxu0 0.0
    %76 = vmatpush1.msra.mxu0 0.0
    %77 = vmatprep.subr.mxu0 0.0
    %78 = vmatpush1.msra.mxu0 0.0
    %79 = vmatprep.subr.mxu0 0.0
    %80 = vmatpush1.msra.mxu0 0.0
    %81 = vmatprep.subr.mxu0 0.0
    %82 = vmatpush1.msra.mxu0 %v45
    %83 = vmatprep.subr.mxu0 0.0
    %84 = vmatpush1.msra.mxu0 %v44
    %85 = vmatprep.subr.mxu0 0.0
    %86 = vmatpush1.msra.mxu0 %v43
    %87 = vmatprep.subr.mxu0 0.0
    %88 = vmatpush1.msra.mxu0 %v42
    %89 = vmatprep.subr.mxu0 0.0
    %90 = vmatpush2.msra.mxu0 0.0
    %91 = vmatprep.subr.mxu0 0.0
    %92 = vmatpush2.msra.mxu0 0.0
    %93 = vmatprep.subr.mxu0 0.0
    %94 = vmatpush2.msra.mxu0 0.0
    %95 = vmatprep.subr.mxu0 0.0
    %96 = vmatpush2.msra.mxu0 0.0
    %97 = vmatprep.subr.mxu0 0.0
    %98 = vmatpush2.msra.mxu0 0.0
    %99 = vmatprep.subr.mxu0 0.0
    %100 = vmatpush2.msra.mxu0 0.0
    %101 = vmatprep.subr.mxu0 0.0
    %102 = vmatpush2.msra.mxu0 0.0
    %103 = vmatprep.subr.mxu0 0.0
    %104 = vmatpush2.msra.mxu0 0.0
    %105 = vmatprep.subr.mxu0 0.0
    %106 = vmatpush2.msra.mxu0 0.0
    %107 = vmatprep.subr.mxu0 0.0
    %108 = vmatpush2.msra.mxu0 0.0
    %109 = vmatprep.subr.mxu0 0.0
    %110 = vmatpush2.msra.mxu0 0.0
    %111 = vmatprep.subr.mxu0 0.0
    %112 = vmatpush2.msra.mxu0 0.0
    %113 = vmatprep.subr.mxu0 0.0
    %114 = vmatpush2.msra.mxu0 0.0
    %115 = vmatprep.subr.mxu0 0.0
    %116 = vmatpush2.msra.mxu0 0.0
    %117 = vmatprep.subr.mxu0 0.0
    %118 = vmatpush2.msra.mxu0 0.0
    %119 = vmatprep.subr.mxu0 0.0
    %120 = vmatpush2.msra.mxu0 0.0
    %121 = vmatprep.mubr.f32.mxu0 0.0
    %122 = vmatmul.mubr.f32.gmra.mxu0 %v55
    %v123 = vpop.f32.mrf.mxu0
    %v124 = vadd.f32 %v51, %v123
    %v125 = vpop.f32.mrf.mxu0
    %126 = vdwg.mxu0
    %vm127 = vcmp.ge.f32.partialorder %v124, 0.0
    %v128 = vmul.f32 %v124, 0.01
    %v129 = vsel %vm127, %v124, %v128
    %v130 = vld [vmem:[%s3] sm:$0xff]
    %v131 = vld [vmem:[%s3 + $0x8] sm:$0xff]
    %v132 = vld [vmem:[%s3 + $0x10] sm:$0xff]
    %v133 = vld [vmem:[%s3 + $0x18] sm:$0xff]
    %v134 = vld [vmem:[%s3 + $0x20] sm:$0xff]
    %v135 = vld [vmem:[%s3 + $0x28] sm:$0xff]
    %v136 = vld [vmem:[%s3 + $0x30] sm:$0xff]
    %v137 = vld [vmem:[%s3 + $0x38] sm:$0xff]
    %v138 = vld [vmem:[%s4] sm:$0x1]
    %v140 = vlaneseq
    %v141 = vshrl.u32 %v140, 7
    %v142 = vsub.s32 0, %v141
    %v143 = vrot.slane %v138, %v142
    %vm145 = vcmask 523264
    %v147 = vsel %vm145, %v129, 0
    %149 = vmatprep.subr.mxu0 0.0
    %150 = vmatpush1.msra.mxu0 0.0
    %151 = vmatprep.subr.mxu0 0.0
    %152 = vmatpush1.msra.mxu0 0.0
    %153 = vmatprep.subr.mxu0 0.0
    %154 = vmatpush1.msra.mxu0 0.0
    %155 = vmatprep.subr.mxu0 0.0
    %156 = vmatpush1.msra.mxu0 0.0
    %157 = vmatprep.subr.mxu0 0.0
    %158 = vmatpush1.msra.mxu0 0.0
    %159 = vmatprep.subr.mxu0 0.0
    %160 = vmatpush1.msra.mxu0 0.0
    %161 = vmatprep.subr.mxu0 0.0
    %162 = vmatpush1.msra.mxu0 0.0
    %163 = vmatprep.subr.mxu0 0.0
    %164 = vmatpush1.msra.mxu0 0.0
    %165 = vmatprep.subr.mxu0 0.0
    %166 = vmatpush1.msra.mxu0 %v137
    %167 = vmatprep.subr.mxu0 0.0
    %168 = vmatpush1.msra.mxu0 %v136
    %169 = vmatprep.subr.mxu0 0.0
    %170 = vmatpush1.msra.mxu0 %v135
    %171 = vmatprep.subr.mxu0 0.0
    %172 = vmatpush1.msra.mxu0 %v134
    %173 = vmatprep.subr.mxu0 0.0
    %174 = vmatpush1.msra.mxu0 %v133
    %175 = vmatprep.subr.mxu0 0.0
    %176 = vmatpush1.msra.mxu0 %v132
    %177 = vmatprep.subr.mxu0 0.0
    %178 = vmatpush1.msra.mxu0 %v131
    %179 = vmatprep.subr.mxu0 0.0
    %180 = vmatpush1.msra.mxu0 %v130
    %181 = vmatprep.subr.mxu0 0.0
    %182 = vmatpush2.msra.mxu0 0.0
    %183 = vmatprep.subr.mxu0 0.0
    %184 = vmatpush2.msra.mxu0 0.0
    %185 = vmatprep.subr.mxu0 0.0
    %186 = vmatpush2.msra.mxu0 0.0
    %187 = vmatprep.subr.mxu0 0.0
    %188 = vmatpush2.msra.mxu0 0.0
    %189 = vmatprep.subr.mxu0 0.0
    %190 = vmatpush2.msra.mxu0 0.0
    %191 = vmatprep.subr.mxu0 0.0
    %192 = vmatpush2.msra.mxu0 0.0
    %193 = vmatprep.subr.mxu0 0.0
    %194 = vmatpush2.msra.mxu0 0.0
    %195 = vmatprep.subr.mxu0 0.0
    %196 = vmatpush2.msra.mxu0 0.0
    %197 = vmatprep.subr.mxu0 0.0
    %198 = vmatpush2.msra.mxu0 0.0
    %199 = vmatprep.subr.mxu0 0.0
    %200 = vmatpush2.msra.mxu0 0.0
    %201 = vmatprep.subr.mxu0 0.0
    %202 = vmatpush2.msra.mxu0 0.0
    %203 = vmatprep.subr.mxu0 0.0
    %204 = vmatpush2.msra.mxu0 0.0
    %205 = vmatprep.subr.mxu0 0.0
    %206 = vmatpush2.msra.mxu0 0.0
    %207 = vmatprep.subr.mxu0 0.0
    %208 = vmatpush2.msra.mxu0 0.0
    %209 = vmatprep.subr.mxu0 0.0
    %210 = vmatpush2.msra.mxu0 0.0
    %211 = vmatprep.subr.mxu0 0.0
    %212 = vmatpush2.msra.mxu0 0.0
    %213 = vmatprep.mubr.f32.mxu0 0.0
    %214 = vmatmul.mubr.f32.gmra.mxu0 %v147
    %v215 = vpop.f32.mrf.mxu0
    %v216 = vadd.f32 %v143, %v215
    %v217 = vpop.f32.mrf.mxu0
    %218 = vdwg.mxu0
    %vm219 = vcmp.ge.f32.partialorder %v216, 0.0
    %v220 = vmul.f32 %v216, 0.01
    %v221 = vsel %vm219, %v216, %v220
    %v222 = vld [vmem:[%s5] sm:$0xff]
    %v223 = vld [vmem:[%s5 + $0x8] sm:$0xff]
    %v224 = vld [vmem:[%s5 + $0x10] sm:$0xff]
    %v225 = vld [vmem:[%s5 + $0x18] sm:$0xff]
    %v226 = vld [vmem:[%s5 + $0x20] sm:$0xff]
    %v227 = vld [vmem:[%s5 + $0x28] sm:$0xff]
    %v228 = vld [vmem:[%s5 + $0x30] sm:$0xff]
    %v229 = vld [vmem:[%s5 + $0x38] sm:$0xff]
    %v230 = vld [vmem:[%s6] sm:$0x1]
    %v232 = vlaneseq
    %v233 = vshrl.u32 %v232, 7
    %v234 = vsub.s32 0, %v233
    %v235 = vrot.slane %v230, %v234
    %v238 = vsel %vm145, %v221, 0
    %240 = vmatprep.subr.mxu0 0.0
    %241 = vmatpush1.msra.mxu0 0.0
    %242 = vmatprep.subr.mxu0 0.0
    %243 = vmatpush1.msra.mxu0 0.0
    %244 = vmatprep.subr.mxu0 0.0
    %245 = vmatpush1.msra.mxu0 0.0
    %246 = vmatprep.subr.mxu0 0.0
    %247 = vmatpush1.msra.mxu0 0.0
    %248 = vmatprep.subr.mxu0 0.0
    %249 = vmatpush1.msra.mxu0 0.0
    %250 = vmatprep.subr.mxu0 0.0
    %251 = vmatpush1.msra.mxu0 0.0
    %252 = vmatprep.subr.mxu0 0.0
    %253 = vmatpush1.msra.mxu0 0.0
    %254 = vmatprep.subr.mxu0 0.0
    %255 = vmatpush1.msra.mxu0 0.0
    %256 = vmatprep.subr.mxu0 0.0
    %257 = vmatpush1.msra.mxu0 %v229
    %258 = vmatprep.subr.mxu0 0.0
    %259 = vmatpush1.msra.mxu0 %v228
    %260 = vmatprep.subr.mxu0 0.0
    %261 = vmatpush1.msra.mxu0 %v227
    %262 = vmatprep.subr.mxu0 0.0
    %263 = vmatpush1.msra.mxu0 %v226
    %264 = vmatprep.subr.mxu0 0.0
    %265 = vmatpush1.msra.mxu0 %v225
    %266 = vmatprep.subr.mxu0 0.0
    %267 = vmatpush1.msra.mxu0 %v224
    %268 = vmatprep.subr.mxu0 0.0
    %269 = vmatpush1.msra.mxu0 %v223
    %270 = vmatprep.subr.mxu0 0.0
    %271 = vmatpush1.msra.mxu0 %v222
    %272 = vmatprep.subr.mxu0 0.0
    %273 = vmatpush2.msra.mxu0 0.0
    %274 = vmatprep.subr.mxu0 0.0
    %275 = vmatpush2.msra.mxu0 0.0
    %276 = vmatprep.subr.mxu0 0.0
    %277 = vmatpush2.msra.mxu0 0.0
    %278 = vmatprep.subr.mxu0 0.0
    %279 = vmatpush2.msra.mxu0 0.0
    %280 = vmatprep.subr.mxu0 0.0
    %281 = vmatpush2.msra.mxu0 0.0
    %282 = vmatprep.subr.mxu0 0.0
    %283 = vmatpush2.msra.mxu0 0.0
    %284 = vmatprep.subr.mxu0 0.0
    %285 = vmatpush2.msra.mxu0 0.0
    %286 = vmatprep.subr.mxu0 0.0
    %287 = vmatpush2.msra.mxu0 0.0
    %288 = vmatprep.subr.mxu0 0.0
    %289 = vmatpush2.msra.mxu0 0.0
    %290 = vmatprep.subr.mxu0 0.0
    %291 = vmatpush2.msra.mxu0 0.0
    %292 = vmatprep.subr.mxu0 0.0
    %293 = vmatpush2.msra.mxu0 0.0
    %294 = vmatprep.subr.mxu0 0.0
    %295 = vmatpush2.msra.mxu0 0.0
    %296 = vmatprep.subr.mxu0 0.0
    %297 = vmatpush2.msra.mxu0 0.0
    %298 = vmatprep.subr.mxu0 0.0
    %299 = vmatpush2.msra.mxu0 0.0
    %300 = vmatprep.subr.mxu0 0.0
    %301 = vmatpush2.msra.mxu0 0.0
    %302 = vmatprep.subr.mxu0 0.0
    %303 = vmatpush2.msra.mxu0 0.0
    %304 = vmatprep.mubr.f32.mxu0 0.0
    %305 = vmatmul.mubr.f32.gmra.mxu0 %v238
    %v306 = vpop.f32.mrf.mxu0
    %v307 = vadd.f32 %v235, %v306
    %v308 = vpop.f32.mrf.mxu0
    %309 = vdwg.mxu0
    %vm310 = vcmask 130048
    %311 = vst.msk [vmem:[#allocation5] sm:$0xff] %vm310, %v307
    // Predicated region
    $region34: #{tpu_custom_call.1} parent=1 // pred_check
      _
    $region35: #{tpu_custom_call.1} parent=1 // pred_check_branch
      %313 = sbr.rel (0) target = $region37
    $region36: #{tpu_custom_call.1} parent=1 // pred_region
      %s315 = ssub.s32 128, 128
      %316 = vsyncadd [#allocation4], %s315
      %s318 = sshll.u32 [#allocation5], 4
      %s319 = int_to_ptr.vmem [resolvable:$true] %s318
      %321 = dma.vmem_to_hbm [thread:$0]  %s319, 128, %s7, [#allocation4]
    $region37: #{tpu_custom_call.1} parent=1 // pred_fallthru
      _
    // Predicated region
    $region38: #{tpu_custom_call.1} parent=1 // pred_check
      _
    $region39: #{tpu_custom_call.1} parent=1 // pred_check_branch
      %323 = sbr.rel (0) target = $region41
    $region40: #{tpu_custom_call.1} parent=1 // pred_region
      %324 = dma.done [#allocation4], 128
    $region41: #{tpu_custom_call.1} parent=1 // pred_fallthru
      _
    %325 = vsyncpa [#allocation3], 1
    %326 = vsyncpa [#allocation4], 1

</llo_original>
